<compile_context>
chip_gen: v7x
topology: tpu7x:2x2x1
jax: 0.10.0
libtpu: 0.0.40
codegen_flags: <defaults>
</compile_context>

<pallas_src>
import functools

import jax
import jax.numpy as jnp
from jax.experimental import pallas as pl
from jax.experimental.pallas import tpu as pltpu


def _ropend_kernel(x_ref, cos_ref, sin_ref, o_ref):
    """out = x * cos_i + pair_swap(x) * sin_signed   (interleaved complex rotate).

    cos_i[2k] = cos_i[2k+1] = cos(theta_k)
    sin_signed[2k] = -sin(theta_k), sin_signed[2k+1] = +sin(theta_k)
    => out[2k]   = x[2k]*cos - x[2k+1]*sin   (real part)
       out[2k+1] = x[2k]*sin + x[2k+1]*cos   (imag part)
    """
    x = x_ref[...].astype(jnp.float32)        # (TILE_S, L)
    c = cos_ref[...].astype(jnp.float32)      # (TILE_S, L)
    s = sin_ref[...].astype(jnp.float32)      # (TILE_S, L), sign folded in
    lane = x.shape[-1]
    # Lane-parity mask (one cheap VALU cmp per vreg; kernel is HBM-bound).
    lane_idx = jax.lax.broadcasted_iota(jnp.int32, x.shape, dimension=x.ndim - 1)
    is_even = (lane_idx & 1) == 0
    # Pair swap: even lane j takes x[j+1], odd lane j takes x[j-1].
    # (Wrapped values at the row ends are never selected because L is even.)
    x_next = pltpu.roll(x, shift=lane - 1, axis=1)   # out[j] = x[(j+1) % L]
    x_prev = pltpu.roll(x, shift=1, axis=1)          # out[j] = x[(j-1) % L]
    x_swap = jnp.where(is_even, x_next, x_prev)
    o_ref[...] = (x * c + x_swap * s).astype(o_ref.dtype)


def make_interleaved_rotations(channel_dims, feature_dim, base=10000.0,
                               dtype=jnp.float32):
    """Reproduces RoPENd_Torch.__init__'s rotations buffer, lane-interleaved.

    Returns (cos_i, sin_i) of shape (*channel_dims, feature_dim) where each
    cos/sin value is repeated for both members of its complex pair and the
    (-1, +1) sign of the real/imag contributions is folded into sin_i.
    """
    n_dims = len(channel_dims)
    assert feature_dim % (2 * n_dims) == 0, (
        f"shape[-1] ({feature_dim}) is not divisible by 2 * len(shape[:-1]) "
        f"({2 * n_dims})")
    k_max = feature_dim // (2 * n_dims)
    theta_ks = 1.0 / (base ** (jnp.arange(k_max, dtype=jnp.float32) / k_max))
    grids = jnp.meshgrid(
        *[jnp.arange(d, dtype=jnp.float32) for d in channel_dims], indexing="ij")
    # (*channel_dims, n_dims * k_max) == (*channel_dims, feature_dim // 2)
    angles = jnp.concatenate([g[..., None] * theta_ks for g in grids], axis=-1)
    cos_i = jnp.repeat(jnp.cos(angles), 2, axis=-1)                   # (..., D)
    sign = jnp.tile(jnp.array([-1.0, 1.0], jnp.float32), feature_dim // 2)
    sin_i = jnp.repeat(jnp.sin(angles), 2, axis=-1) * sign            # (..., D)
    return cos_i.astype(dtype), sin_i.astype(dtype)


def _choose_layout(flat, itemsize):
    """Pick (lane, sub_padded, tile_s) for the flattened per-batch stream.

    lane is a multiple of 128 (unmasked, full-lane stores); sub_padded*lane is
    the (possibly padded) flattened length; tile_s is the sublane tile. All
    padding starts at an even flat offset, so complex pairs are never split.
    """
    lane = None
    for cand in (1024, 512, 256, 128):          # prefer lane-dense 1024
        if flat % cand == 0:
            lane = cand
            break
    if lane is None:
        # Pad the stream up to a full lane multiple instead of masked stores.
        lane = 128 if flat < 8 * 1024 else 1024
    sub = pl.cdiv(flat, lane)

    # ~2 MiB per array per block (dtype-aware); sublane tile aligned to the
    # native packing: 8 rows for f32, 16 for bf16, 32 for int8/fp8.
    max_block_bytes = 2 << 20
    sub_align = max(8, 32 // max(1, itemsize))
    max_rows = max(sub_align,
                   (max_block_bytes // (lane * itemsize)) // sub_align * sub_align)

    if sub <= max_rows:
        return lane, sub, sub                    # whole sublane axis in one block

    # Look for a divisor of sub inside the block-size sweet spot.
    min_rows = min(max_rows, 64)
    t = max_rows
    while t >= min_rows:
        if sub % t == 0:
            return lane, sub, t
        t -= sub_align
    # No usable divisor: pad sub up to a multiple of a sweet-spot tile.
    tile_s = min(max_rows, 256)
    sub_padded = pl.cdiv(sub, tile_s) * tile_s
    return lane, sub_padded, tile_s


@functools.partial(jax.jit, static_argnums=(3, 4, 5, 6))
def _ropend_forward(x, cos2, sin2, flat, sub_p, lane, tile_s):
    """x: (B, *channel_dims, D); cos2/sin2: (sub_p, lane) precomputed tables."""
    B = x.shape[0]
    orig_shape = x.shape
    x_flat = x.reshape(B, flat)                   # row-major flatten (free)
    pad = sub_p * lane - flat
    if pad:
        x_flat = jnp.pad(x_flat, ((0, 0), (0, pad)))
    x3 = x_flat.reshape(B, sub_p, lane)

    n_s = sub_p // tile_s
    x_spec = pl.BlockSpec((None, tile_s, lane), lambda s, b: (b, s, 0))
    rot_spec = pl.BlockSpec((tile_s, lane), lambda s, b: (s, 0))

    # With >=2 s-tiles, keep B "arbitrary" so megacore splits the s axis and
    # each core's cos/sin tile stays resident across all inner batch steps.
    dim_sem = ("parallel", "arbitrary") if n_s >= 2 else ("parallel", "parallel")

    out = pl.pallas_call(
        _ropend_kernel,
        out_shape=jax.ShapeDtypeStruct((B, sub_p, lane), x.dtype),
        grid_spec=pltpu.PrefetchScalarGridSpec(
            num_scalar_prefetch=0,
            # B innermost: rotation-table block index is constant across the
            # inner steps, so cos/sin tiles are not re-DMA'd per batch element.
            grid=(n_s, B),
            in_specs=[x_spec, rot_spec, rot_spec],
            out_specs=x_spec,
        ),
        compiler_params=pltpu.CompilerParams(
            dimension_semantics=dim_sem,
            vmem_limit_bytes=48 * 1024 * 1024,
        ),
    )(x3, cos2, sin2)

    out = out.reshape(B, sub_p * lane)
    if pad:
        out = out[:, :flat]
    return out.reshape(orig_shape)


class RoPENd:
    """N-d rotary positional embedding; rotation tables precomputed at init.

    `shape = (*channel_dims, feature_dim)`; forward takes x of shape
    (B, *channel_dims, feature_dim), matching the PyTorch module's broadcast.
    """

    def __init__(self, shape, base=10000.0, dtype=jnp.float32):
        channel_dims, feature_dim = tuple(shape[:-1]), int(shape[-1])
        self.channel_dims = channel_dims
        self.feature_dim = feature_dim
        flat = feature_dim
        for d in channel_dims:
            flat *= int(d)
        self.flat = flat

        itemsize = jnp.dtype(dtype).itemsize
        lane, sub_p, tile_s = _choose_layout(flat, itemsize)
        self.lane, self.sub_p, self.tile_s = lane, sub_p, tile_s

        cos_i, sin_i = make_interleaved_rotations(
            channel_dims, feature_dim, base=base, dtype=dtype)
        cos_flat = cos_i.reshape(-1)
        sin_flat = sin_i.reshape(-1)
        pad = sub_p * lane - flat
        if pad:
            cos_flat = jnp.pad(cos_flat, (0, pad))
            sin_flat = jnp.pad(sin_flat, (0, pad))
        self.cos2 = cos_flat.reshape(sub_p, lane)
        self.sin2 = sin_flat.reshape(sub_p, lane)
        # TODO(synk): optionally add input_output_aliases + donated x to reuse
        # x's HBM buffer when this op is embedded in a larger donated graph.

    def __call__(self, x):
        assert x.shape[1:] == (*self.channel_dims, self.feature_dim), (
            f"x shape {x.shape} does not match module shape "
            f"{(*self.channel_dims, self.feature_dim)}")
        return _ropend_forward(x, self.cos2, self.sin2,
                               self.flat, self.sub_p, self.lane, self.tile_s)


def ropend_reference(x, base=10000.0):
    """Pure-JAX reference matching the PyTorch forward."""
    channel_dims = x.shape[1:-1]
    D = x.shape[-1]
    n_dims = len(channel_dims)
    k_max = D // (2 * n_dims)
    theta_ks = 1.0 / (base ** (jnp.arange(k_max, dtype=jnp.float32) / k_max))
    grids = jnp.meshgrid(
        *[jnp.arange(d, dtype=jnp.float32) for d in channel_dims], indexing="ij")
    angles = jnp.concatenate([g[..., None] * theta_ks for g in grids], axis=-1)
    cos_a, sin_a = jnp.cos(angles), jnp.sin(angles)
    x_r = x.reshape(*x.shape[:-1], D // 2, 2)
    xe, xo = x_r[..., 0], x_r[..., 1]
    oe = xe * cos_a - xo * sin_a
    oo = xe * sin_a + xo * cos_a
    return jnp.stack([oe, oo], axis=-1).reshape(x.shape)


if __name__ == "__main__":
    # Module shape = (H, W, D); x carries an extra leading batch dim that
    # broadcasts against the (H, W, D//2) rotations buffer.
    B, H, W, D = 2, 8, 8, 32
    key = jax.random.PRNGKey(0)
    x = jax.random.normal(key, (B, H, W, D), dtype=jnp.float32)

    rope = RoPENd((H, W, D))
    out = jax.block_until_ready(rope(x))

    ref = ropend_reference(x)
    assert out.shape == (B, H, W, D)
    assert jnp.allclose(out, ref, atol=1e-5, rtol=1e-5), "mismatch vs reference"

    print("KERNEL_OK")
</pallas_src>

<mosaic_0001>
module attributes {stable_mosaic.version = 11 : i64} {
  func.func @_ropend_kernel(%arg0: i32, %arg1: i32, %arg2: memref<1x2x1024xf32, #tpu.memory_space<vmem>>, %arg3: memref<2x1024xf32, #tpu.memory_space<vmem>>, %arg4: memref<2x1024xf32, #tpu.memory_space<vmem>>, %arg5: memref<1x2x1024xf32, #tpu.memory_space<vmem>>) attributes {dimension_semantics = [#tpu.dimension_semantics<parallel>, #tpu.dimension_semantics<parallel>], iteration_bounds = array<i64: 1, 2>, scalar_prefetch = 0 : i64, scratch_operands = 0 : i64, tpu.core_type = #tpu.core_type<tc>, window_params = [{transform_indices = @transform_0, window_bounds = array<i64: 1, 2, 1024>}, {transform_indices = @transform_1, window_bounds = array<i64: 2, 1024>}, {transform_indices = @transform_2, window_bounds = array<i64: 2, 1024>}, {transform_indices = @transform_3, window_bounds = array<i64: 1, 2, 1024>}]} {
    %c0 = arith.constant 0 : index
    %c0_0 = arith.constant 0 : index
    %c0_1 = arith.constant 0 : index
    %0 = vector.load %arg2[%c0, %c0_0, %c0_1] : memref<1x2x1024xf32, #tpu.memory_space<vmem>>, vector<1x2x1024xf32>
    %1 = vector.shape_cast %0 : vector<1x2x1024xf32> to vector<2x1024xf32>
    %c0_2 = arith.constant 0 : index
    %c0_3 = arith.constant 0 : index
    %2 = vector.load %arg3[%c0_2, %c0_3] : memref<2x1024xf32, #tpu.memory_space<vmem>>, vector<2x1024xf32>
    %c0_4 = arith.constant 0 : index
    %c0_5 = arith.constant 0 : index
    %3 = vector.load %arg4[%c0_4, %c0_5] : memref<2x1024xf32, #tpu.memory_space<vmem>>, vector<2x1024xf32>
    %4 = tpu.iota {dimensions = array<i32: 1>} : vector<2x1024xi32>
    %c1_i32 = arith.constant 1 : i32
    %5 = vector.broadcast %c1_i32 : i32 to vector<2x1024xi32>
    %6 = arith.andi %4, %5 : vector<2x1024xi32>
    %c0_i32 = arith.constant 0 : i32
    %7 = vector.broadcast %c0_i32 : i32 to vector<2x1024xi32>
    %8 = arith.cmpi eq, %6, %7 : vector<2x1024xi32>
    %c1023_i32 = arith.constant 1023 : i32
    %9 = tpu.dynamic_rotate %1 by %c1023_i32 dim 1 : vector<2x1024xf32>, i32 -> vector<2x1024xf32>
    %c1_i32_6 = arith.constant 1 : i32
    %10 = tpu.dynamic_rotate %1 by %c1_i32_6 dim 1 : vector<2x1024xf32>, i32 -> vector<2x1024xf32>
    %11 = arith.select %8, %9, %10 : vector<2x1024xi1>, vector<2x1024xf32>
    %12 = arith.mulf %1, %2 : vector<2x1024xf32>
    %13 = arith.mulf %11, %3 : vector<2x1024xf32>
    %14 = arith.addf %12, %13 : vector<2x1024xf32>
    %c0_7 = arith.constant 0 : index
    %c0_8 = arith.constant 0 : index
    %c0_9 = arith.constant 0 : index
    %15 = vector.load %arg5[%c0_7, %c0_8, %c0_9] : memref<1x2x1024xf32, #tpu.memory_space<vmem>>, vector<1x2x1024xf32>
    %16 = vector.shape_cast %15 : vector<1x2x1024xf32> to vector<2x1024xf32>
    %17 = vector.shape_cast %14 : vector<2x1024xf32> to vector<1x2x1024xf32>
    tpu.vector_store %arg5[%c0_7, %c0_8, %c0_9], %17 {strides = array<i32>} : memref<1x2x1024xf32, #tpu.memory_space<vmem>>, vector<1x2x1024xf32>,
    return
  }
  func.func @transform_0(%arg0: i32, %arg1: i32) -> (i32, i32, i32) {
    %c0_i32 = arith.constant 0 : i32
    %c0_i32_0 = arith.constant 0 : i32
    return %arg1, %arg0, %c0_i32 : i32, i32, i32
  }
  func.func @transform_1(%arg0: i32, %arg1: i32) -> (i32, i32) {
    %c0_i32 = arith.constant 0 : i32
    %c0_i32_0 = arith.constant 0 : i32
    return %arg0, %c0_i32 : i32, i32
  }
  func.func @transform_2(%arg0: i32, %arg1: i32) -> (i32, i32) {
    %c0_i32 = arith.constant 0 : i32
    %c0_i32_0 = arith.constant 0 : i32
    return %arg0, %c0_i32 : i32, i32
  }
  func.func @transform_3(%arg0: i32, %arg1: i32) -> (i32, i32, i32) {
    %c0_i32 = arith.constant 0 : i32
    %c0_i32_0 = arith.constant 0 : i32
    return %arg1, %arg0, %c0_i32 : i32, i32, i32
  }
}

</mosaic_0001>

<llo_original>
// kernel: _ropend_forward.1
$region0: #{_ropend_forward.1}
  #allocation0 [shape = 'u32[]', space=smem, size = 0x4, offset = 0x4, fixed_abs, tag = 'smem constant byte address 0x4 - core index']
  #allocation1 [shape = 'u32[144,128]{1,0:T(1,128)}', space=vmem, size = 0x12000, scoped, tag = 'internal scratch']
  %s0 = inlined_call_operand.vmem [shape: f32[2,2,1024], index: 0, kind: input, shape index: {}]
  %s1 = inlined_call_operand.vmem [shape: f32[2,1024], index: 1, kind: input, shape index: {}]
  %s2 = inlined_call_operand.vmem [shape: f32[2,1024], index: 2, kind: input, shape index: {}]
  %s3 = inlined_call_operand.vmem [shape: f32[2,2,1024], index: 3, kind: output, shape index: {}]
  %s4 = sld [smem:[#allocation0]]
  $region45: #{_ropend_forward.1} parent=0
    _
  %s6 = ssub.s32 1, %s4
  %s7 = scalar_select 0, %s6, %s4
  loop: start=0, step=1, limit=4
  $region2: #{_ropend_forward.1} parent=0 // loop_pre_header
    _
  $region3: #{_ropend_forward.1} parent=0 // loop_header
    %s9 = sphi 0, %s13
    %p10 = scmp.ge.s32.totalorder %s9, 4
    %s16 = sphi 0, %s28
    %s17 = sphi 0, %s24
    %s18 = sphi 0, %s16
    %s19 = sphi 0, %s17
    %s20 = sphi 0, %s18
    %s21 = sphi 0, %s19
    %s33 = sphi 0, %s35
    %s36 = sphi 0, %s33
    %s37 = sphi 0, %s36
    %s53 = sphi 0, %s37
    %s59 = sphi 0, %s61
    %s62 = sphi 0, %s59
    %s63 = sphi 0, %s62
    %s79 = sphi 0, %s63
    %s85 = sphi 0, %s87
    %s88 = sphi 0, %s85
    %s89 = sphi 0, %s88
    %s105 = sphi 0, %s89
    %s113 = sphi 0, %s115
    %s116 = sphi 0, %s113
    %s117 = sphi 0, %s116
    %s133 = sphi 0, %s117
  $region4: #{_ropend_forward.1} parent=0 // loop_header_branch
    %12 = sbr.rel (%p10) target = $region8
  $region5: #{_ropend_forward.1} parent=0 // loop_body
    %s14 = ssub.s32 %s9, 1
    %s15 = ssub.s32 %s9, 2
    %s22 = sadd.s32 1, %s17
    %p23 = scmp.ge.s32.totalorder %s22, 2
    %s24 = scalar_select %p23, 0, %s22
    %s25 = sadd.s32 1, %s16
    %s26 = scalar_select %p23, %s25, %s16
    %p27 = scmp.ge.s32.totalorder %s26, 1
    %s28 = scalar_select %p27, 0, %s26
    %s29 = ssub.s32 %s17, %s24
    %s30 = ssub.s32 %s16, %s28
    %s31 = sor.u32 %s29, %s30
    %p32 = scmp.eq.s32.totalorder %s31, 0
    %s34 = sadd.s32 %s33, 1
    %s35 = scalar_select %p32, %s33, %s34
    %p38 = pneg %p32
    %p39 = scmp.eq.s32.totalorder %s9, 1
    %p40 = por %p38, %p39
    %p41 = scmp.ne.s32.totalorder %s33, %s36
    %p42 = scmp.eq.s32.totalorder %s9, 0
    %p43 = por %p41, %p42
    %p44 = scmp.ne.s32.totalorder %s33, %s36
    %p45 = scmp.eq.s32.totalorder %s14, 1
    %p46 = por %p44, %p45
    %p47 = scmp.ne.s32.totalorder %s36, %s37
    %p48 = scmp.eq.s32.totalorder %s14, 0
    %p49 = por %p47, %p48
    %p50 = scmp.ne.s32.totalorder %s36, %s37
    %p51 = scmp.eq.s32.totalorder %s15, 1
    %p52 = por %p50, %p51
    %p54 = scmp.ne.s32.totalorder %s37, %s53
    %p55 = scmp.eq.s32.totalorder %s15, 0
    %p56 = por %p54, %p55
    %s57 = ssub.s32 %s16, %s28
    %p58 = scmp.eq.s32.totalorder %s57, 0
    %s60 = sadd.s32 %s59, 1
    %s61 = scalar_select %p58, %s59, %s60
    %p64 = pneg %p58
    %p65 = scmp.eq.s32.totalorder %s9, 1
    %p66 = por %p64, %p65
    %p67 = scmp.ne.s32.totalorder %s59, %s62
    %p68 = scmp.eq.s32.totalorder %s9, 0
    %p69 = por %p67, %p68
    %p70 = scmp.ne.s32.totalorder %s59, %s62
    %p71 = scmp.eq.s32.totalorder %s14, 1
    %p72 = por %p70, %p71
    %p73 = scmp.ne.s32.totalorder %s62, %s63
    %p74 = scmp.eq.s32.totalorder %s14, 0
    %p75 = por %p73, %p74
    %p76 = scmp.ne.s32.totalorder %s62, %s63
    %p77 = scmp.eq.s32.totalorder %s15, 1
    %p78 = por %p76, %p77
    %p80 = scmp.ne.s32.totalorder %s63, %s79
    %p81 = scmp.eq.s32.totalorder %s15, 0
    %p82 = por %p80, %p81
    %s83 = ssub.s32 %s16, %s28
    %p84 = scmp.eq.s32.totalorder %s83, 0
    %s86 = sadd.s32 %s85, 1
    %s87 = scalar_select %p84, %s85, %s86
    %p90 = pneg %p84
    %p91 = scmp.eq.s32.totalorder %s9, 1
    %p92 = por %p90, %p91
    %p93 = scmp.ne.s32.totalorder %s85, %s88
    %p94 = scmp.eq.s32.totalorder %s9, 0
    %p95 = por %p93, %p94
    %p96 = scmp.ne.s32.totalorder %s85, %s88
    %p97 = scmp.eq.s32.totalorder %s14, 1
    %p98 = por %p96, %p97
    %p99 = scmp.ne.s32.totalorder %s88, %s89
    %p100 = scmp.eq.s32.totalorder %s14, 0
    %p101 = por %p99, %p100
    %p102 = scmp.ne.s32.totalorder %s88, %s89
    %p103 = scmp.eq.s32.totalorder %s15, 1
    %p104 = por %p102, %p103
    %p106 = scmp.ne.s32.totalorder %s89, %s105
    %p107 = scmp.eq.s32.totalorder %s15, 0
    %p108 = por %p106, %p107
    %s109 = ssub.s32 %s17, %s24
    %s110 = ssub.s32 %s16, %s28
    %s111 = sor.u32 %s109, %s110
    %p112 = scmp.eq.s32.totalorder %s111, 0
    %s114 = sadd.s32 %s113, 1
    %s115 = scalar_select %p112, %s113, %s114
    %p118 = pneg %p112
    %p119 = scmp.eq.s32.totalorder %s9, 1
    %p120 = por %p118, %p119
    %p121 = scmp.ne.s32.totalorder %s113, %s116
    %p122 = scmp.eq.s32.totalorder %s9, 0
    %p123 = por %p121, %p122
    %p124 = scmp.ne.s32.totalorder %s113, %s116
    %p125 = scmp.eq.s32.totalorder %s14, 1
    %p126 = por %p124, %p125
    %p127 = scmp.ne.s32.totalorder %s116, %s117
    %p128 = scmp.eq.s32.totalorder %s14, 0
    %p129 = por %p127, %p128
    %p130 = scmp.ne.s32.totalorder %s116, %s117
    %p131 = scmp.eq.s32.totalorder %s15, 1
    %p132 = por %p130, %p131
    %p134 = scmp.ne.s32.totalorder %s117, %s133
    %p135 = scmp.eq.s32.totalorder %s15, 0
    %p136 = por %p134, %p135
    %p137 = scmp.le.s32.totalorder 1, %s9
    %p138 = scmp.lt.s32.totalorder %s9, 3
    %p139 = pnand %p137, %p138
    %p140 = pneg %p139
    // Predicated region
    $region9: #{_ropend_forward.1} parent=5 // pred_check
      _
    $region10: #{_ropend_forward.1} parent=5 // pred_check_branch
      %142 = sbr.rel (%p139) target = $region12
    $region11: #{_ropend_forward.1} parent=5 // pred_region
      %s143 = ssub.s32 %s9, 1
      // Predicated region
      $region13: #{_ropend_forward.1} parent=11 // pred_check
        %p144 = pneg %p75
      $region14: #{_ropend_forward.1} parent=11 // pred_check_branch
        %146 = sbr.rel (%p144) target = $region16
      $region15: #{_ropend_forward.1} parent=11 // pred_region
        %p147 = scmp.lt.s32.totalorder %s18, 0
        %s148 = scalar_select %p147, %s18, 0
        %s149 = smul.addr %s148, 8
        %s150 = smul.addr %s149, 2
        %s151 = scalar_lea.vmem %s1, %s150
      $region16: #{_ropend_forward.1} parent=11 // pred_fallthru
        _
      // Predicated region
      $region17: #{_ropend_forward.1} parent=11 // pred_check
        %p152 = pneg %p101
      $region18: #{_ropend_forward.1} parent=11 // pred_check_branch
        %154 = sbr.rel (%p152) target = $region20
      $region19: #{_ropend_forward.1} parent=11 // pred_region
        %p155 = scmp.lt.s32.totalorder %s18, 0
        %s156 = scalar_select %p155, %s18, 0
        %s157 = smul.addr %s156, 8
        %s158 = smul.addr %s157, 2
        %s159 = scalar_lea.vmem %s2, %s158
      $region20: #{_ropend_forward.1} parent=11 // pred_fallthru
        _
    $region12: #{_ropend_forward.1} parent=5 // pred_fallthru
      _
    %p160 = scmp.lt.s32.totalorder %s9, 2
    // Predicated region
    $region21: #{_ropend_forward.1} parent=5 // pred_check
      %p161 = pneg %p160
    $region22: #{_ropend_forward.1} parent=5 // pred_check_branch
      %163 = sbr.rel (%p161) target = $region24
    $region23: #{_ropend_forward.1} parent=5 // pred_region
      // Predicated region
      $region25: #{_ropend_forward.1} parent=23 // pred_check
        %p164 = pneg %p43
      $region26: #{_ropend_forward.1} parent=23 // pred_check_branch
        %166 = sbr.rel (%p164) target = $region28
      $region27: #{_ropend_forward.1} parent=23 // pred_region
        %p167 = scmp.lt.s32.totalorder %s17, 1
        %s168 = scalar_select %p167, %s17, 1
        %p169 = scmp.lt.s32.totalorder %s16, 0
        %s170 = scalar_select %p169, %s16, 0
        %s171 = smul.addr %s170, 8
        %s172 = smul.addr %s168, 8
        %s173 = sadd.s32 %s171, %s172
        %s174 = smul.addr %s173, 2
        %s175 = scalar_lea.vmem %s0, %s174
      $region28: #{_ropend_forward.1} parent=23 // pred_fallthru
        _
    $region24: #{_ropend_forward.1} parent=5 // pred_fallthru
      _
    %p176 = scmp.le.s32.totalorder 1, %s9
    %p177 = scmp.lt.s32.totalorder %s9, 3
    %p178 = pnand %p176, %p177
    %p179 = pneg %p178
    // Predicated region
    $region29: #{_ropend_forward.1} parent=5 // pred_check
      _
    $region30: #{_ropend_forward.1} parent=5 // pred_check_branch
      %181 = sbr.rel (%p178) target = $region32
    $region31: #{_ropend_forward.1} parent=5 // pred_region
      %s182 = ssub.s32 %s9, 1
      %p183 = scmp.lt.s32.totalorder %s19, 1
      %s184 = scalar_select %p183, %s19, 1
      %p185 = scmp.lt.s32.totalorder %s18, 0
      %s186 = scalar_select %p185, %s18, 0
      %s187 = smul.addr %s186, 8
      %s188 = smul.addr %s184, 8
      %s189 = sadd.s32 %s187, %s188
      %s190 = smul.addr %s189, 2
      %s191 = scalar_lea.vmem %s0, %s190
      %p192 = pneg %p49
      %p193 = pneg %p46
      %p194 = scmp.lt.s32.totalorder %s18, 0
      %s195 = scalar_select %p194, %s18, 0
      %s196 = smul.addr %s195, 8
      %s197 = smul.addr %s196, 2
      %s198 = scalar_lea.vmem %s1, %s197
      %p199 = pneg %p75
      %p200 = pneg %p72
      %p201 = scmp.lt.s32.totalorder %s18, 0
      %s202 = scalar_select %p201, %s18, 0
      %s203 = smul.addr %s202, 8
      %s204 = smul.addr %s203, 2
      %s205 = scalar_lea.vmem %s2, %s204
      %p206 = pneg %p101
      %p207 = pneg %p98
      %p208 = pneg %p129
      %p209 = pneg %p126
      %p210 = scmp.lt.s32.totalorder %s19, 1
      %s211 = scalar_select %p210, %s19, 1
      %p212 = scmp.lt.s32.totalorder %s18, 0
      %s213 = scalar_select %p212, %s18, 0
      %s214 = smul.addr %s213, 8
      %s215 = smul.addr %s211, 8
      %s216 = sadd.s32 %s214, %s215
      %s217 = smul.addr %s216, 2
      %s218 = scalar_lea.vmem %s3, %s217
      %p219 = scmp.lt.s32.totalorder %s19, 1
      %s220 = scalar_select %p219, %s19, 1
      %p221 = scmp.lt.s32.totalorder %s18, 0
      %s222 = scalar_select %p221, %s18, 0
      %s223 = smul.addr %s222, 8
      %s224 = smul.addr %s220, 8
      %s225 = sadd.s32 %s223, %s224
      %s226 = smul.addr %s225, 2
      %s227 = scalar_lea.vmem %s0, %s226
      %p228 = scmp.lt.s32.totalorder %s18, 0
      %s229 = scalar_select %p228, %s18, 0
      %s230 = smul.addr %s229, 8
      %s231 = smul.addr %s230, 2
      %s232 = scalar_lea.vmem %s1, %s231
      %p233 = scmp.lt.s32.totalorder %s18, 0
      %s234 = scalar_select %p233, %s18, 0
      %s235 = smul.addr %s234, 8
      %s236 = smul.addr %s235, 2
      %s237 = scalar_lea.vmem %s2, %s236
      %p238 = scmp.lt.s32.totalorder %s19, 1
      %s239 = scalar_select %p238, %s19, 1
      %p240 = scmp.lt.s32.totalorder %s18, 0
      %s241 = scalar_select %p240, %s18, 0
      %s242 = smul.addr %s241, 8
      %s243 = smul.addr %s239, 8
      %s244 = sadd.s32 %s242, %s243
      %s245 = smul.addr %s244, 2
      %s246 = scalar_lea.vmem %s3, %s245
      %v247 = vld [vmem:[%s227] sm:$0xff]
      %v248 = vld [vmem:[%s227 + $0x8] sm:$0xff]
      %v249 = vld [vmem:[%s232] sm:$0xff]
      %v250 = vld [vmem:[%s232 + $0x8] sm:$0xff]
      %v251 = vld [vmem:[%s237] sm:$0xff]
      %v252 = vld [vmem:[%s237 + $0x8] sm:$0xff]
      %v253 = vlaneseq
      %v254 = vand.u32 %v253, 127
      %v255 = vadd.s32 %v254, 128
      %v256 = vadd.s32 %v254, 256
      %v257 = vadd.s32 %v254, 384
      %v258 = vadd.s32 %v254, 512
      %v259 = vadd.s32 %v254, 640
      %v260 = vadd.s32 %v254, 768
      %v261 = vadd.s32 %v254, 896
      %v262 = vand.u32 %v254, 1
      %v263 = vand.u32 %v255, 1
      %v264 = vand.u32 %v256, 1
      %v265 = vand.u32 %v257, 1
      %v266 = vand.u32 %v258, 1
      %v267 = vand.u32 %v259, 1
      %v268 = vand.u32 %v260, 1
      %v269 = vand.u32 %v261, 1
      %vm270 = vcmp.eq.s32.totalorder %v262, 0
      %vm271 = vcmp.eq.s32.totalorder %v263, 0
      %vm272 = vcmp.eq.s32.totalorder %v264, 0
      %vm273 = vcmp.eq.s32.totalorder %v265, 0
      %vm274 = vcmp.eq.s32.totalorder %v266, 0
      %vm275 = vcmp.eq.s32.totalorder %v267, 0
      %vm276 = vcmp.eq.s32.totalorder %v268, 0
      %vm277 = vcmp.eq.s32.totalorder %v269, 0
      %v280 = vcombine.high %v247, %v247
      %v282 = vunpack.c.l.s4 1983009808
      %v283 = vunpack.c.0.s8 %v282
      %v284 = vlaneseq
      %v285 = vshrl.u32 %v284, 7
      %v286 = vsub.s32 %v283, %v285
      %v287 = vrot.slane %v247, %v286
      %v289 = vunpack.c.l.s4 1983009808
      %v290 = vunpack.c.0.s8 %v289
      %v291 = vlaneseq
      %v292 = vshrl.u32 %v291, 7
      %v293 = vsub.s32 %v290, %v292
      %v294 = vrot.slane %v280, %v293
      %v295 = vcombine.high %v287, %v287
      %v296 = vcombine.high %v294, %v294
      %v297 = vcombine.high %v248, %v248
      %v299 = vunpack.c.l.s4 1983009808
      %v300 = vunpack.c.0.s8 %v299
      %v301 = vlaneseq
      %v302 = vshrl.u32 %v301, 7
      %v303 = vsub.s32 %v300, %v302
      %v304 = vrot.slane %v248, %v303
      %v306 = vunpack.c.l.s4 1983009808
      %v307 = vunpack.c.0.s8 %v306
      %v308 = vlaneseq
      %v309 = vshrl.u32 %v308, 7
      %v310 = vsub.s32 %v307, %v309
      %v311 = vrot.slane %v297, %v310
      %v312 = vcombine.high %v304, %v304
      %v313 = vcombine.high %v311, %v311
      %322 = vrot.lane.b32.xlu0 %v287, 127
      %v323 = vpop.permute.xlu0 %322
      %324 = vrot.lane.b32.xlu0 %v295, 127
      %v325 = vpop.permute.xlu0 %324
      %326 = vrot.lane.b32.xlu0 %v294, 127
      %v327 = vpop.permute.xlu0 %326
      %328 = vrot.lane.b32.xlu0 %v296, 127
      %v329 = vpop.permute.xlu0 %328
      %330 = vrot.lane.b32.xlu0 %v304, 127
      %v331 = vpop.permute.xlu0 %330
      %332 = vrot.lane.b32.xlu0 %v312, 127
      %v333 = vpop.permute.xlu0 %332
      %334 = vrot.lane.b32.xlu0 %v311, 127
      %v335 = vpop.permute.xlu0 %334
      %336 = vrot.lane.b32.xlu0 %v313, 127
      %v337 = vpop.permute.xlu0 %336
      %vm338 = vcmp.lt.s32.totalorder %v254, 127
      %v339 = vsel %vm338, %v335, %v337
      %v340 = vsel %vm338, %v333, %v335
      %v341 = vsel %vm338, %v331, %v333
      %v342 = vsel %vm338, %v329, %v331
      %v343 = vsel %vm338, %v327, %v329
      %v344 = vsel %vm338, %v325, %v327
      %v345 = vsel %vm338, %v323, %v325
      %v346 = vsel %vm338, %v337, %v323
      %347 = vrot.lane.b32.xlu0 %v287, 1
      %v348 = vpop.permute.xlu0 %347
      %349 = vrot.lane.b32.xlu0 %v295, 1
      %v350 = vpop.permute.xlu0 %349
      %351 = vrot.lane.b32.xlu0 %v294, 1
      %v352 = vpop.permute.xlu0 %351
      %353 = vrot.lane.b32.xlu0 %v296, 1
      %v354 = vpop.permute.xlu0 %353
      %355 = vrot.lane.b32.xlu0 %v304, 1
      %v356 = vpop.permute.xlu0 %355
      %357 = vrot.lane.b32.xlu0 %v312, 1
      %v358 = vpop.permute.xlu0 %357
      %359 = vrot.lane.b32.xlu0 %v311, 1
      %v360 = vpop.permute.xlu0 %359
      %361 = vrot.lane.b32.xlu0 %v313, 1
      %v362 = vpop.permute.xlu0 %361
      %vm363 = vcmp.lt.s32.totalorder %v254, 1
      %v364 = vsel %vm363, %v360, %v362
      %v365 = vsel %vm363, %v358, %v360
      %v366 = vsel %vm363, %v356, %v358
      %v367 = vsel %vm363, %v354, %v356
      %v368 = vsel %vm363, %v352, %v354
      %v369 = vsel %vm363, %v350, %v352
      %v370 = vsel %vm363, %v348, %v350
      %v371 = vsel %vm363, %v362, %v348
      %v372 = vsel %vm270, %v345, %v371
      %v373 = vsel %vm271, %v344, %v370
      %v374 = vsel %vm272, %v343, %v369
      %v375 = vsel %vm273, %v342, %v368
      %v376 = vsel %vm274, %v341, %v367
      %v377 = vsel %vm275, %v340, %v366
      %v378 = vsel %vm276, %v339, %v365
      %v379 = vsel %vm277, %v346, %v364
      %v380 = vmul.f32 %v247, %v249
      %v381 = vmul.f32 %v248, %v250
      %v384 = vcombine.high %v251, %v251
      %v386 = vunpack.c.l.s4 1983009808
      %v387 = vunpack.c.0.s8 %v386
      %v388 = vlaneseq
      %v389 = vshrl.u32 %v388, 7
      %v390 = vsub.s32 %v387, %v389
      %v391 = vrot.slane %v251, %v390
      %v393 = vunpack.c.l.s4 1983009808
      %v394 = vunpack.c.0.s8 %v393
      %v395 = vlaneseq
      %v396 = vshrl.u32 %v395, 7
      %v397 = vsub.s32 %v394, %v396
      %v398 = vrot.slane %v384, %v397
      %v399 = vcombine.high %v391, %v391
      %v400 = vcombine.high %v398, %v398
      %v401 = vcombine.high %v252, %v252
      %v403 = vunpack.c.l.s4 1983009808
      %v404 = vunpack.c.0.s8 %v403
      %v405 = vlaneseq
      %v406 = vshrl.u32 %v405, 7
      %v407 = vsub.s32 %v404, %v406
      %v408 = vrot.slane %v252, %v407
      %v410 = vunpack.c.l.s4 1983009808
      %v411 = vunpack.c.0.s8 %v410
      %v412 = vlaneseq
      %v413 = vshrl.u32 %v412, 7
      %v414 = vsub.s32 %v411, %v413
      %v415 = vrot.slane %v401, %v414
      %v416 = vcombine.high %v408, %v408
      %v417 = vcombine.high %v415, %v415
      %v426 = vmul.f32 %v372, %v391
      %v427 = vmul.f32 %v373, %v399
      %v428 = vmul.f32 %v374, %v398
      %v429 = vmul.f32 %v375, %v400
      %v430 = vmul.f32 %v376, %v408
      %v431 = vmul.f32 %v377, %v416
      %v432 = vmul.f32 %v378, %v415
      %v433 = vmul.f32 %v379, %v417
      %v442 = vcombine.low %v426, %v427
      %v443 = vcombine.low %v428, %v429
      %v445 = vunpack.c.l.s4 1983009808
      %v446 = vunpack.c.0.s8 %v445
      %v447 = vlaneseq
      %v448 = vshrl.u32 %v447, 7
      %v449 = vsub.s32 %v446, %v448
      %v450 = vrot.slane %v442, %v449
      %v452 = vunpack.c.l.s4 1983009808
      %v453 = vunpack.c.0.s8 %v452
      %v454 = vlaneseq
      %v455 = vshrl.u32 %v454, 7
      %v456 = vsub.s32 %v453, %v455
      %v457 = vrot.slane %v443, %v456
      %v458 = vcombine.low %v450, %v457
      %v459 = vcombine.low %v430, %v431
      %v460 = vcombine.low %v432, %v433
      %v462 = vunpack.c.l.s4 1983009808
      %v463 = vunpack.c.0.s8 %v462
      %v464 = vlaneseq
      %v465 = vshrl.u32 %v464, 7
      %v466 = vsub.s32 %v463, %v465
      %v467 = vrot.slane %v459, %v466
      %v469 = vunpack.c.l.s4 1983009808
      %v470 = vunpack.c.0.s8 %v469
      %v471 = vlaneseq
      %v472 = vshrl.u32 %v471, 7
      %v473 = vsub.s32 %v470, %v472
      %v474 = vrot.slane %v460, %v473
      %v475 = vcombine.low %v467, %v474
      %v478 = vadd.f32 %v380, %v458
      %v479 = vadd.f32 %v381, %v475
      %480 = vst [vmem:[%s246] sm:$0xff] %v478
      %481 = vst [vmem:[%s246 + $0x8] sm:$0xff] %v479
      %p482 = scmp.lt.s32.totalorder %s19, 1
      %s483 = scalar_select %p482, %s19, 1
      %p484 = scmp.lt.s32.totalorder %s18, 0
      %s485 = scalar_select %p484, %s18, 0
      %s486 = smul.addr %s485, 8
      %s487 = smul.addr %s483, 8
      %s488 = sadd.s32 %s486, %s487
      %s489 = smul.addr %s488, 2
      %s490 = scalar_lea.vmem %s3, %s489
      // Predicated region
      $region33: #{_ropend_forward.1} parent=31 // pred_check
        %p491 = pneg %p126
      $region34: #{_ropend_forward.1} parent=31 // pred_check_branch
        %493 = sbr.rel (%p491) target = $region36
      $region35: #{_ropend_forward.1} parent=31 // pred_region
        _
      $region36: #{_ropend_forward.1} parent=31 // pred_fallthru
        _
    $region32: #{_ropend_forward.1} parent=5 // pred_fallthru
      _
    %p494 = scmp.le.s32.totalorder 2, %s9
    // Predicated region
    $region37: #{_ropend_forward.1} parent=5 // pred_check
      %p495 = pneg %p494
    $region38: #{_ropend_forward.1} parent=5 // pred_check_branch
      %497 = sbr.rel (%p495) target = $region40
    $region39: #{_ropend_forward.1} parent=5 // pred_region
      %s498 = ssub.s32 %s9, 2
      // Predicated region
      $region41: #{_ropend_forward.1} parent=39 // pred_check
        %p499 = pneg %p132
      $region42: #{_ropend_forward.1} parent=39 // pred_check_branch
        %501 = sbr.rel (%p499) target = $region44
      $region43: #{_ropend_forward.1} parent=39 // pred_region
        %p502 = scmp.lt.s32.totalorder %s21, 1
        %s503 = scalar_select %p502, %s21, 1
        %p504 = scmp.lt.s32.totalorder %s20, 0
        %s505 = scalar_select %p504, %s20, 0
        %s506 = smul.addr %s505, 8
        %s507 = smul.addr %s503, 8
        %s508 = sadd.s32 %s506, %s507
        %s509 = smul.addr %s508, 2
        %s510 = scalar_lea.vmem %s3, %s509
      $region44: #{_ropend_forward.1} parent=39 // pred_fallthru
        _
    $region40: #{_ropend_forward.1} parent=5 // pred_fallthru
      _
  $region6: #{_ropend_forward.1} parent=0 // loop_footer
    %s13 = sadd.s32 1, %s9
  $region7: #{_ropend_forward.1} parent=0 // loop_footer_branch
    %8 = sbr.rel target = $region3
  $region8: #{_ropend_forward.1} parent=0 // loop_exit
    _

</llo_original>
